<compile_context>
chip_gen: v7x
topology: tpu7x:2x2x1
jax: 0.10.0
libtpu: 0.0.40
codegen_flags: <defaults>
</compile_context>

<pallas_src>
import jax
import jax.numpy as jnp
from jax.experimental import pallas as pl
from jax.experimental.pallas import tpu as pltpu


def _combiner_kernel(e1_ref, e2_ref, w1t_ref, w2t_ref, b_ref, o_ref):
    # In-kernel activation cast (VPU has ample slack under the DMAs);
    # MXU matmuls accumulate in f32; f32 bias added post-accumulation.
    cdt = w1t_ref.dtype
    e1 = e1_ref[...].astype(cdt)
    e2 = e2_ref[...].astype(cdt)
    acc = jnp.dot(e1, w1t_ref[...], preferred_element_type=jnp.float32)
    acc = acc + jnp.dot(e2, w2t_ref[...], preferred_element_type=jnp.float32)
    o_ref[...] = (acc + b_ref[...]).astype(o_ref.dtype)


def _round_up(x, m):
    return ((x + m - 1) // m) * m


def _vmem_budget_and_limit():
    """Generation-aware (budget, vmem_limit) in bytes."""
    cap = 64 * 1024 * 1024
    try:
        info = pltpu.get_tpu_info()
        cap = int(getattr(info, "vmem_capacity_bytes", cap))
    except Exception:
        pass
    if cap <= 64 * 1024 * 1024:                       # v7x: 64 MiB per TC
        return 40 * 1024 * 1024, 48 * 1024 * 1024
    return 96 * 1024 * 1024, 108 * 1024 * 1024        # v5e / v6e: 128 MiB


def _pick_block_b(B, D, block_n, weight_bytes, act_itemsize, out_itemsize, budget):
    """Largest aligned batch tile fitting the VMEM budget; >=2 grid steps when B allows."""
    if B <= 8:
        return B
    # Per-row pipelined bytes: double-buffered emb1+emb2 tiles (input dtype)
    # plus the double-buffered output tile.
    row_bytes = 2 * (2 * D * act_itemsize + block_n * out_itemsize)
    avail = max(budget - weight_bytes, 8 * row_bytes)
    tm = min(B, 4096, avail // row_bytes)
    # Guarantee >=2 grid steps so the "parallel" batch axis feeds both v7x TCs.
    if B >= 16:
        tm = min(tm, _round_up(pl.cdiv(B, 2), 8))
    # 16-row alignment avoids packed-sublane relayouts for bf16 tiles; 8 minimum.
    align = 16 if tm >= 16 else 8
    tm = max(8, (tm // align) * align)
    return int(min(tm, B))


def linear_combiner(emb1, emb2, weight, bias, *, compute_dtype=jnp.bfloat16,
                    out_dtype=None, block_b=None, block_n=None):
    """Pallas equivalent of LinearCombiner.forward.

    emb1, emb2: (B, D); weight: (D, 2D) in PyTorch nn.Linear layout; bias: (D,).
    compute_dtype: MXU operand dtype. Default bf16 (f32 accumulation) is an
      explicit precision tradeoff; pass None to keep full f32 operands.
    out_dtype: output dtype (defaults to emb1.dtype); bf16 cuts output HBM traffic.
    """
    B, D = emb1.shape
    assert emb2.shape == (B, D)
    assert weight.shape == (D, 2 * D)
    assert bias.shape == (D,)
    out_dtype = jnp.dtype(emb1.dtype) if out_dtype is None else jnp.dtype(out_dtype)

    # Weight is a model constant: split / transpose / cast it ONCE outside the
    # hot path (per-call here; hoist to parameter prep in a real model).
    w_dtype = jnp.dtype(weight.dtype if compute_dtype is None else compute_dtype)
    w1t = weight[:, :D].T.astype(w_dtype)        # (D_in, D_out): MXU-friendly layout
    w2t = weight[:, D:].T.astype(w_dtype)
    b2d = bias.reshape(1, D).astype(jnp.float32)

    act_itemsize = jnp.dtype(emb1.dtype).itemsize
    w_itemsize = w_dtype.itemsize
    out_itemsize = out_dtype.itemsize

    budget, vmem_limit = _vmem_budget_and_limit()

    # ---- output-column (N) tile --------------------------------------------
    if block_n is None:
        full_w_bytes = 2 * D * D * w_itemsize + D * 4
        if D <= 128 or full_w_bytes <= budget // 2:
            block_n = D
        else:
            bn = ((budget // 2) // (2 * (2 * D * w_itemsize))) // 128 * 128
            block_n = int(min(D, max(128, bn)))
    nn = pl.cdiv(D, block_n)
    single_buf_weights = (nn == 1)
    weight_bytes = 2 * D * block_n * w_itemsize + block_n * 4
    if not single_buf_weights:
        weight_bytes *= 2                          # double-buffered when N-tiled

    # ---- batch (M) tile ------------------------------------------------------
    if block_b is None:
        block_b = _pick_block_b(B, D, block_n, weight_bytes,
                                act_itemsize, out_itemsize, budget)
    nb = pl.cdiv(B, block_b)
    grid = (nb, nn)

    def _w_spec(shape):
        # Constant-over-grid weight/bias blocks: single-buffer to halve VMEM
        # residency; fall back to default double-buffering when N-tiled.
        if single_buf_weights:
            return pl.BlockSpec(shape, lambda i, j: (0, j),
                                pipeline_mode=pl.Buffered(1))
        return pl.BlockSpec(shape, lambda i, j: (0, j))

    cost = pl.CostEstimate(
        flops=2 * B * (2 * D) * D,
        transcendentals=0,
        bytes_accessed=int(2 * B * D * act_itemsize                     # emb1 + emb2
                           + (2 * D * D * w_itemsize + D * 4)
                           * (nb if nn > 1 else 1)                      # weights + bias
                           + B * D * out_itemsize),                     # output
    )

    return pl.pallas_call(
        _combiner_kernel,
        out_shape=jax.ShapeDtypeStruct((B, D), out_dtype),
        grid_spec=pltpu.PrefetchScalarGridSpec(
            num_scalar_prefetch=0,
            grid=grid,
            in_specs=[
                pl.BlockSpec((block_b, D), lambda i, j: (i, 0)),   # emb1 tile (pipelined)
                pl.BlockSpec((block_b, D), lambda i, j: (i, 0)),   # emb2 tile (pipelined)
                _w_spec((D, block_n)),                             # W1^T (VMEM-resident)
                _w_spec((D, block_n)),                             # W2^T (VMEM-resident)
                _w_spec((1, block_n)),                             # bias  (VMEM-resident)
            ],
            out_specs=pl.BlockSpec((block_b, block_n), lambda i, j: (i, j)),
        ),
        compiler_params=pltpu.CompilerParams(
            dimension_semantics=("parallel", "parallel"),
            vmem_limit_bytes=int(vmem_limit),
        ),
        cost_estimate=cost,
    )(emb1, emb2, w1t, w2t, b2d)


def _reference(emb1, emb2, weight, bias, dtype=None):
    """Pure-JAX reference (matches torch: cat(dim=-1) then x @ W.T + b)."""
    x = jnp.concatenate([emb1, emb2], axis=-1)
    if dtype is not None:
        y = jnp.dot(x.astype(dtype), weight.astype(dtype).T,
                    preferred_element_type=jnp.float32)
        return y + bias
    return x @ weight.T + bias


if __name__ == "__main__":
    key = jax.random.PRNGKey(0)

    def run_case(B, D):
        k1, k2, kw, kb = jax.random.split(jax.random.fold_in(key, 1000 * B + D), 4)
        emb1 = jax.random.normal(k1, (B, D), dtype=jnp.float32)
        emb2 = jax.random.normal(k2, (B, D), dtype=jnp.float32)
        # Deterministic synthetic parameters in PyTorch nn.Linear shapes:
        #   weight: (embedding_dim, embedding_dim * 2), bias: (embedding_dim,)
        bound = 1.0 / float(2.0 * D) ** 0.5
        weight = jax.random.uniform(kw, (D, 2 * D), minval=-bound, maxval=bound,
                                    dtype=jnp.float32)
        bias = jax.random.uniform(kb, (D,), minval=-bound, maxval=bound,
                                  dtype=jnp.float32)

        out = jax.block_until_ready(linear_combiner(emb1, emb2, weight, bias))
        assert out.shape == (B, D) and out.dtype == emb1.dtype

        # Same bf16 operand rounding as the kernel's MXU inputs -> tight tolerance.
        ref_bf16 = _reference(emb1, emb2, weight, bias, dtype=jnp.bfloat16)
        assert jnp.allclose(out, ref_bf16, atol=2e-3, rtol=2e-3), (
            f"mismatch vs bf16-rounded reference (B={B}, D={D})")
        # Full-f32 reference; tolerance widened for bf16 MXU operands.
        ref_f32 = _reference(emb1, emb2, weight, bias)
        assert jnp.allclose(out, ref_f32, atol=5e-2, rtol=5e-2), (
            f"mismatch vs f32 reference (B={B}, D={D})")

    run_case(B=16, D=128)   # lane-dense output, 2 batch tiles (both v7x TCs busy)
    run_case(B=20, D=128)   # B not divisible by block_b -> partial final batch tile
    run_case(B=8, D=32)     # small-D path (masked lane stores; correct, not fast)
    # TODO(synk): if D < 128 is a real workload, fold batch rows into the lane
    # dim (or pad D to 128) in the wrapper for lane-dense stores.

    print("KERNEL_OK")
</pallas_src>

<mosaic_0001>
module attributes {stable_mosaic.version = 11 : i64} {
  func.func @_combiner_kernel(%arg0: i32, %arg1: i32, %arg2: memref<8x128xf32, #tpu.memory_space<vmem>>, %arg3: memref<8x128xf32, #tpu.memory_space<vmem>>, %arg4: memref<128x128xbf16, #tpu.memory_space<vmem>>, %arg5: memref<128x128xbf16, #tpu.memory_space<vmem>>, %arg6: memref<1x128xf32, #tpu.memory_space<vmem>>, %arg7: memref<8x128xf32, #tpu.memory_space<vmem>>) attributes {dimension_semantics = [#tpu.dimension_semantics<parallel>, #tpu.dimension_semantics<parallel>], iteration_bounds = array<i64: 2, 1>, scalar_prefetch = 0 : i64, scratch_operands = 0 : i64, tpu.core_type = #tpu.core_type<tc>, window_params = [{transform_indices = @transform_0, window_bounds = array<i64: 8, 128>}, {transform_indices = @transform_1, window_bounds = array<i64: 8, 128>}, {pipeline_mode = #tpu.pipeline_mode<synchronous>, transform_indices = @transform_2, window_bounds = array<i64: 128, 128>}, {pipeline_mode = #tpu.pipeline_mode<synchronous>, transform_indices = @transform_3, window_bounds = array<i64: 128, 128>}, {pipeline_mode = #tpu.pipeline_mode<synchronous>, transform_indices = @transform_4, window_bounds = array<i64: 1, 128>}, {transform_indices = @transform_5, window_bounds = array<i64: 8, 128>}]} {
    %c0 = arith.constant 0 : index
    %c0_0 = arith.constant 0 : index
    %0 = vector.load %arg2[%c0, %c0_0] : memref<8x128xf32, #tpu.memory_space<vmem>>, vector<8x128xf32>
    %1 = arith.truncf %0 : vector<8x128xf32> to vector<8x128xbf16>
    %c0_1 = arith.constant 0 : index
    %c0_2 = arith.constant 0 : index
    %2 = vector.load %arg3[%c0_1, %c0_2] : memref<8x128xf32, #tpu.memory_space<vmem>>, vector<8x128xf32>
    %3 = arith.truncf %2 : vector<8x128xf32> to vector<8x128xbf16>
    %c0_3 = arith.constant 0 : index
    %c0_4 = arith.constant 0 : index
    %4 = vector.load %arg4[%c0_3, %c0_4] : memref<128x128xbf16, #tpu.memory_space<vmem>>, vector<128x128xbf16>
    %cst = arith.constant dense<0.000000e+00> : vector<8x128xf32>
    %5 = tpu.matmul %1, %4, %cst {dimension_numbers = #tpu.dot_dimension_numbers<[1], [0], [0], [1], [0, 0, 1, 1], [], []>} : vector<8x128xbf16>, vector<128x128xbf16>, vector<8x128xf32> -> vector<8x128xf32>
    %c0_5 = arith.constant 0 : index
    %c0_6 = arith.constant 0 : index
    %6 = vector.load %arg5[%c0_5, %c0_6] : memref<128x128xbf16, #tpu.memory_space<vmem>>, vector<128x128xbf16>
    %cst_7 = arith.constant dense<0.000000e+00> : vector<8x128xf32>
    %7 = tpu.matmul %3, %6, %cst_7 {dimension_numbers = #tpu.dot_dimension_numbers<[1], [0], [0], [1], [0, 0, 1, 1], [], []>} : vector<8x128xbf16>, vector<128x128xbf16>, vector<8x128xf32> -> vector<8x128xf32>
    %8 = arith.addf %5, %7 : vector<8x128xf32>
    %c0_8 = arith.constant 0 : index
    %c0_9 = arith.constant 0 : index
    %9 = vector.load %arg6[%c0_8, %c0_9] : memref<1x128xf32, #tpu.memory_space<vmem>>, vector<1x128xf32>
    %10 = vector.broadcast %9 : vector<1x128xf32> to vector<8x128xf32>
    %11 = arith.addf %8, %10 : vector<8x128xf32>
    %c0_10 = arith.constant 0 : index
    %c0_11 = arith.constant 0 : index
    %12 = vector.load %arg7[%c0_10, %c0_11] : memref<8x128xf32, #tpu.memory_space<vmem>>, vector<8x128xf32>
    tpu.vector_store %arg7[%c0_10, %c0_11], %11 {strides = array<i32>} : memref<8x128xf32, #tpu.memory_space<vmem>>, vector<8x128xf32>,
    return
  }
  func.func @transform_0(%arg0: i32, %arg1: i32) -> (i32, i32) {
    %c0_i32 = arith.constant 0 : i32
    %c0_i32_0 = arith.constant 0 : i32
    return %arg0, %c0_i32 : i32, i32
  }
  func.func @transform_1(%arg0: i32, %arg1: i32) -> (i32, i32) {
    %c0_i32 = arith.constant 0 : i32
    %c0_i32_0 = arith.constant 0 : i32
    return %arg0, %c0_i32 : i32, i32
  }
  func.func @transform_2(%arg0: i32, %arg1: i32) -> (i32, i32) {
    %c0_i32 = arith.constant 0 : i32
    %c0_i32_0 = arith.constant 0 : i32
    return %c0_i32, %arg1 : i32, i32
  }
  func.func @transform_3(%arg0: i32, %arg1: i32) -> (i32, i32) {
    %c0_i32 = arith.constant 0 : i32
    %c0_i32_0 = arith.constant 0 : i32
    return %c0_i32, %arg1 : i32, i32
  }
  func.func @transform_4(%arg0: i32, %arg1: i32) -> (i32, i32) {
    %c0_i32 = arith.constant 0 : i32
    %c0_i32_0 = arith.constant 0 : i32
    return %c0_i32, %arg1 : i32, i32
  }
  func.func @transform_5(%arg0: i32, %arg1: i32) -> (i32, i32) {
    %c0_i32 = arith.constant 0 : i32
    return %arg0, %arg1 : i32, i32
  }
}

</mosaic_0001>

<llo_original>
// kernel: tpu_custom_call.1
$region0: #{tpu_custom_call.1}
  #allocation0 [shape = 'u32[]', space=smem, size = 0x4, offset = 0x4, fixed_abs, tag = 'smem constant byte address 0x4 - core index']
  #allocation1 [shape = 'u32[144,128]{1,0:T(1,128)}', space=vmem, size = 0x12000, scoped, tag = 'internal scratch']
  %s0 = inlined_call_operand.hbm [shape: f32[16,128], index: 0, kind: input, shape index: {}]
  %s1 = inlined_call_operand.hbm [shape: f32[16,128], index: 1, kind: input, shape index: {}]
  %s2 = inlined_call_operand.hbm [shape: bf16[128,128], index: 2, kind: input, shape index: {}]
  %s3 = inlined_call_operand.hbm [shape: bf16[128,128], index: 3, kind: input, shape index: {}]
  %s4 = inlined_call_operand.vmem [shape: f32[1,128], index: 4, kind: input, shape index: {}]
  %s5 = inlined_call_operand.hbm [shape: f32[16,128], index: 5, kind: output, shape index: {}]
  %s6 = sld [smem:[#allocation0]]
  $region69: #{tpu_custom_call.1} parent=0
    _
  %s8 = ssub.s32 1, %s6
  %s9 = scalar_select 0, %s8, %s6
  $region1: #{tpu_custom_call.1} parent=0
    #allocation2 [shape = 'u8[8192]{0}', space=vmem, size = 0x2000, scoped, tag = 'input window, operand 0']
    #allocation3 [shape = 's32[2]{0}', space=sflag, size = 0x8, scoped, tag = 'scoped memory for tpu_custom_call.1']
    #allocation4 [shape = 's32[2]{0}', space=sflag, size = 0x8, scoped, tag = 'scoped memory for tpu_custom_call.1']
    #allocation5 [shape = 'u8[8192]{0}', space=vmem, size = 0x2000, scoped, tag = 'input window, operand 1']
    #allocation6 [shape = 's32[2]{0}', space=sflag, size = 0x8, scoped, tag = 'scoped memory for tpu_custom_call.1']
    #allocation7 [shape = 'u8[32768]{0}', space=vmem, size = 0x8000, scoped, tag = 'input window, operand 2, single buffered']
    #allocation8 [shape = 'u8[32768]{0}', space=vmem, size = 0x8000, scoped, tag = 'input window, operand 3, single buffered']
    #allocation9 [shape = 's32[1]{0}', space=sflag, size = 0x4, scoped, tag = 'scoped memory for tpu_custom_call.1']
    #allocation10 [shape = 'u8[8192]{0}', space=vmem, size = 0x2000, scoped, tag = 'output window, operand 0']
    %10 = vsyncpa [#allocation3], 0
    %s11 = scalar_lea.sflag [#allocation3], 1
    %12 = vsyncpa %s11, 0
    %13 = vsyncpa [#allocation6], 0
    %s14 = scalar_lea.sflag [#allocation6], 1
    %15 = vsyncpa %s14, 0
    %16 = vsyncpa [#allocation9], 0
    %17 = vsyncpa [#allocation4], 0
    %s18 = scalar_lea.sflag [#allocation4], 1
    %19 = vsyncpa %s18, 0
    loop: start=0, step=1, limit=4
    $region2: #{tpu_custom_call.1} parent=1 // loop_pre_header
      _
    $region3: #{tpu_custom_call.1} parent=1 // loop_header
      %s21 = sphi 0, %s25
      %p22 = scmp.ge.s32.totalorder %s21, 4
      %s28 = sphi 0, %s40
      %s29 = sphi 0, %s36
      %s30 = sphi 0, %s28
      %s31 = sphi 0, %s29
      %s32 = sphi 0, %s30
      %s33 = sphi 0, %s31
      %s43 = sphi 0, %s45
      %s46 = sphi 0, %s43
      %s47 = sphi 0, %s46
      %s63 = sphi 0, %s47
      %s69 = sphi 0, %s71
      %s72 = sphi 0, %s69
      %s73 = sphi 0, %s72
      %s89 = sphi 0, %s73
      %s95 = sphi 0, %s97
      %s98 = sphi 0, %s95
      %s99 = sphi 0, %s98
      %s115 = sphi 0, %s99
      %s121 = sphi 0, %s123
      %s124 = sphi 0, %s121
      %s125 = sphi 0, %s124
      %s141 = sphi 0, %s125
      %s147 = sphi 0, %s149
      %s150 = sphi 0, %s147
      %s151 = sphi 0, %s150
      %s167 = sphi 0, %s151
      %s175 = sphi 0, %s177
      %s178 = sphi 0, %s175
      %s179 = sphi 0, %s178
      %s195 = sphi 0, %s179
    $region4: #{tpu_custom_call.1} parent=1 // loop_header_branch
      %24 = sbr.rel (%p22) target = $region8
    $region5: #{tpu_custom_call.1} parent=1 // loop_body
      %s26 = ssub.s32 %s21, 1
      %s27 = ssub.s32 %s21, 2
      %s34 = sadd.s32 1, %s29
      %p35 = scmp.ge.s32.totalorder %s34, 1
      %s36 = scalar_select %p35, 0, %s34
      %s37 = sadd.s32 1, %s28
      %s38 = scalar_select %p35, %s37, %s28
      %p39 = scmp.ge.s32.totalorder %s38, 2
      %s40 = scalar_select %p39, 0, %s38
      %s41 = ssub.s32 %s28, %s40
      %p42 = scmp.eq.s32.totalorder %s41, 0
      %s44 = sadd.s32 %s43, 1
      %s45 = scalar_select %p42, %s43, %s44
      %p48 = pneg %p42
      %p49 = scmp.eq.s32.totalorder %s21, 1
      %p50 = por %p48, %p49
      %p51 = scmp.ne.s32.totalorder %s43, %s46
      %p52 = scmp.eq.s32.totalorder %s21, 0
      %p53 = por %p51, %p52
      %p54 = scmp.ne.s32.totalorder %s43, %s46
      %p55 = scmp.eq.s32.totalorder %s26, 1
      %p56 = por %p54, %p55
      %p57 = scmp.ne.s32.totalorder %s46, %s47
      %p58 = scmp.eq.s32.totalorder %s26, 0
      %p59 = por %p57, %p58
      %p60 = scmp.ne.s32.totalorder %s46, %s47
      %p61 = scmp.eq.s32.totalorder %s27, 1
      %p62 = por %p60, %p61
      %p64 = scmp.ne.s32.totalorder %s47, %s63
      %p65 = scmp.eq.s32.totalorder %s27, 0
      %p66 = por %p64, %p65
      %s67 = ssub.s32 %s28, %s40
      %p68 = scmp.eq.s32.totalorder %s67, 0
      %s70 = sadd.s32 %s69, 1
      %s71 = scalar_select %p68, %s69, %s70
      %p74 = pneg %p68
      %p75 = scmp.eq.s32.totalorder %s21, 1
      %p76 = por %p74, %p75
      %p77 = scmp.ne.s32.totalorder %s69, %s72
      %p78 = scmp.eq.s32.totalorder %s21, 0
      %p79 = por %p77, %p78
      %p80 = scmp.ne.s32.totalorder %s69, %s72
      %p81 = scmp.eq.s32.totalorder %s26, 1
      %p82 = por %p80, %p81
      %p83 = scmp.ne.s32.totalorder %s72, %s73
      %p84 = scmp.eq.s32.totalorder %s26, 0
      %p85 = por %p83, %p84
      %p86 = scmp.ne.s32.totalorder %s72, %s73
      %p87 = scmp.eq.s32.totalorder %s27, 1
      %p88 = por %p86, %p87
      %p90 = scmp.ne.s32.totalorder %s73, %s89
      %p91 = scmp.eq.s32.totalorder %s27, 0
      %p92 = por %p90, %p91
      %s93 = ssub.s32 %s29, %s36
      %p94 = scmp.eq.s32.totalorder %s93, 0
      %s96 = sadd.s32 %s95, 1
      %s97 = scalar_select %p94, %s95, %s96
      %p100 = pneg %p94
      %p101 = scmp.eq.s32.totalorder %s21, 1
      %p102 = por %p100, %p101
      %p103 = scmp.ne.s32.totalorder %s95, %s98
      %p104 = scmp.eq.s32.totalorder %s21, 0
      %p105 = por %p103, %p104
      %p106 = scmp.ne.s32.totalorder %s95, %s98
      %p107 = scmp.eq.s32.totalorder %s26, 1
      %p108 = por %p106, %p107
      %p109 = scmp.ne.s32.totalorder %s98, %s99
      %p110 = scmp.eq.s32.totalorder %s26, 0
      %p111 = por %p109, %p110
      %p112 = scmp.ne.s32.totalorder %s98, %s99
      %p113 = scmp.eq.s32.totalorder %s27, 1
      %p114 = por %p112, %p113
      %p116 = scmp.ne.s32.totalorder %s99, %s115
      %p117 = scmp.eq.s32.totalorder %s27, 0
      %p118 = por %p116, %p117
      %s119 = ssub.s32 %s29, %s36
      %p120 = scmp.eq.s32.totalorder %s119, 0
      %s122 = sadd.s32 %s121, 1
      %s123 = scalar_select %p120, %s121, %s122
      %p126 = pneg %p120
      %p127 = scmp.eq.s32.totalorder %s21, 1
      %p128 = por %p126, %p127
      %p129 = scmp.ne.s32.totalorder %s121, %s124
      %p130 = scmp.eq.s32.totalorder %s21, 0
      %p131 = por %p129, %p130
      %p132 = scmp.ne.s32.totalorder %s121, %s124
      %p133 = scmp.eq.s32.totalorder %s26, 1
      %p134 = por %p132, %p133
      %p135 = scmp.ne.s32.totalorder %s124, %s125
      %p136 = scmp.eq.s32.totalorder %s26, 0
      %p137 = por %p135, %p136
      %p138 = scmp.ne.s32.totalorder %s124, %s125
      %p139 = scmp.eq.s32.totalorder %s27, 1
      %p140 = por %p138, %p139
      %p142 = scmp.ne.s32.totalorder %s125, %s141
      %p143 = scmp.eq.s32.totalorder %s27, 0
      %p144 = por %p142, %p143
      %s145 = ssub.s32 %s29, %s36
      %p146 = scmp.eq.s32.totalorder %s145, 0
      %s148 = sadd.s32 %s147, 1
      %s149 = scalar_select %p146, %s147, %s148
      %p152 = pneg %p146
      %p153 = scmp.eq.s32.totalorder %s21, 1
      %p154 = por %p152, %p153
      %p155 = scmp.ne.s32.totalorder %s147, %s150
      %p156 = scmp.eq.s32.totalorder %s21, 0
      %p157 = por %p155, %p156
      %p158 = scmp.ne.s32.totalorder %s147, %s150
      %p159 = scmp.eq.s32.totalorder %s26, 1
      %p160 = por %p158, %p159
      %p161 = scmp.ne.s32.totalorder %s150, %s151
      %p162 = scmp.eq.s32.totalorder %s26, 0
      %p163 = por %p161, %p162
      %p164 = scmp.ne.s32.totalorder %s150, %s151
      %p165 = scmp.eq.s32.totalorder %s27, 1
      %p166 = por %p164, %p165
      %p168 = scmp.ne.s32.totalorder %s151, %s167
      %p169 = scmp.eq.s32.totalorder %s27, 0
      %p170 = por %p168, %p169
      %s171 = ssub.s32 %s28, %s40
      %s172 = ssub.s32 %s29, %s36
      %s173 = sor.u32 %s171, %s172
      %p174 = scmp.eq.s32.totalorder %s173, 0
      %s176 = sadd.s32 %s175, 1
      %s177 = scalar_select %p174, %s175, %s176
      %p180 = pneg %p174
      %p181 = scmp.eq.s32.totalorder %s21, 1
      %p182 = por %p180, %p181
      %p183 = scmp.ne.s32.totalorder %s175, %s178
      %p184 = scmp.eq.s32.totalorder %s21, 0
      %p185 = por %p183, %p184
      %p186 = scmp.ne.s32.totalorder %s175, %s178
      %p187 = scmp.eq.s32.totalorder %s26, 1
      %p188 = por %p186, %p187
      %p189 = scmp.ne.s32.totalorder %s178, %s179
      %p190 = scmp.eq.s32.totalorder %s26, 0
      %p191 = por %p189, %p190
      %p192 = scmp.ne.s32.totalorder %s178, %s179
      %p193 = scmp.eq.s32.totalorder %s27, 1
      %p194 = por %p192, %p193
      %p196 = scmp.ne.s32.totalorder %s179, %s195
      %p197 = scmp.eq.s32.totalorder %s27, 0
      %p198 = por %p196, %p197
      %p199 = scmp.le.s32.totalorder 1, %s21
      %p200 = scmp.lt.s32.totalorder %s21, 3
      %p201 = pnand %p199, %p200
      %p202 = pneg %p201
      // Predicated region
      $region9: #{tpu_custom_call.1} parent=5 // pred_check
        _
      $region10: #{tpu_custom_call.1} parent=5 // pred_check_branch
        %204 = sbr.rel (%p201) target = $region12
      $region11: #{tpu_custom_call.1} parent=5 // pred_region
        %s205 = ssub.s32 %s21, 1
        // Predicated region
        $region13: #{tpu_custom_call.1} parent=11 // pred_check
          %p206 = pneg %p111
        $region14: #{tpu_custom_call.1} parent=11 // pred_check_branch
          %208 = sbr.rel (%p206) target = $region16
        $region15: #{tpu_custom_call.1} parent=11 // pred_region
          %s210 = ssub.s32 1024, 1024
          %211 = vsyncadd [#allocation6], %s210
          %s212 = smul.addr %s31, 64
          %s213 = scalar_lea.hbm %s2, %s212
          %s214 = sshll.u32 [#allocation7], 4
          %s215 = int_to_ptr.vmem [resolvable:$true] %s214
          %220 = dma.hbm_to_vmem [thread:$0]  %s213, 1024, %s215, [#allocation6], 64, 64, 4
        $region16: #{tpu_custom_call.1} parent=11 // pred_fallthru
          _
        // Predicated region
        $region17: #{tpu_custom_call.1} parent=11 // pred_check
          %p221 = pneg %p137
        $region18: #{tpu_custom_call.1} parent=11 // pred_check_branch
          %223 = sbr.rel (%p221) target = $region20
        $region19: #{tpu_custom_call.1} parent=11 // pred_region
          %s225 = ssub.s32 1024, 1024
          %226 = vsyncadd [#allocation9], %s225
          %s227 = smul.addr %s31, 64
          %s228 = scalar_lea.hbm %s3, %s227
          %s229 = sshll.u32 [#allocation8], 4
          %s230 = int_to_ptr.vmem [resolvable:$true] %s229
          %235 = dma.hbm_to_vmem [thread:$0]  %s228, 1024, %s230, [#allocation9], 64, 64, 4
        $region20: #{tpu_custom_call.1} parent=11 // pred_fallthru
          _
        // Predicated region
        $region21: #{tpu_custom_call.1} parent=11 // pred_check
          %p236 = pneg %p163
        $region22: #{tpu_custom_call.1} parent=11 // pred_check_branch
          %238 = sbr.rel (%p236) target = $region24
        $region23: #{tpu_custom_call.1} parent=11 // pred_region
          %p239 = scmp.lt.s32.totalorder %s31, 0
          %s240 = scalar_select %p239, %s31, 0
          %s241 = scalar_lea.vmem %s4, %s240
        $region24: #{tpu_custom_call.1} parent=11 // pred_fallthru
          _
      $region12: #{tpu_custom_call.1} parent=5 // pred_fallthru
        _
      %p242 = scmp.lt.s32.totalorder %s21, 2
      // Predicated region
      $region25: #{tpu_custom_call.1} parent=5 // pred_check
        %p243 = pneg %p242
      $region26: #{tpu_custom_call.1} parent=5 // pred_check_branch
        %245 = sbr.rel (%p243) target = $region28
      $region27: #{tpu_custom_call.1} parent=5 // pred_region
        // Predicated region
        $region29: #{tpu_custom_call.1} parent=27 // pred_check
          %p246 = pneg %p53
        $region30: #{tpu_custom_call.1} parent=27 // pred_check_branch
          %248 = sbr.rel (%p246) target = $region32
        $region31: #{tpu_custom_call.1} parent=27 // pred_region
          %s249 = sand.u32 %s43, 1
          %s250 = scalar_lea.sflag [#allocation3], %s249
          %s251 = sand.u32 %s43, 1
          %s252 = smul.addr %s251, 8
          %s253 = scalar_lea.vmem [#allocation2], %s252
          %s255 = ssub.s32 128, 128
          %256 = vsyncadd %s250, %s255
          %s257 = smul.addr %s28, 128
          %s258 = scalar_lea.hbm %s0, %s257
          %s260 = sshll.u32 %s253, 4
          %s261 = int_to_ptr.vmem [resolvable:$true] %s260
          %263 = dma.hbm_to_vmem [thread:$0]  %s258, 128, %s261, %s250
        $region32: #{tpu_custom_call.1} parent=27 // pred_fallthru
          _
        // Predicated region
        $region33: #{tpu_custom_call.1} parent=27 // pred_check
          %p264 = pneg %p79
        $region34: #{tpu_custom_call.1} parent=27 // pred_check_branch
          %266 = sbr.rel (%p264) target = $region36
        $region35: #{tpu_custom_call.1} parent=27 // pred_region
          %s267 = sand.u32 %s21, 1
          %s268 = scalar_lea.sflag [#allocation6], %s267
          %s269 = sand.u32 %s69, 1
          %s270 = smul.addr %s269, 8
          %s271 = scalar_lea.vmem [#allocation5], %s270
          %s273 = ssub.s32 128, 128
          %274 = vsyncadd %s268, %s273
          %s275 = smul.addr %s28, 128
          %s276 = scalar_lea.hbm %s1, %s275
          %s278 = sshll.u32 %s271, 4
          %s279 = int_to_ptr.vmem [resolvable:$true] %s278
          %281 = dma.hbm_to_vmem [thread:$0]  %s276, 128, %s279, %s268
        $region36: #{tpu_custom_call.1} parent=27 // pred_fallthru
          _
      $region28: #{tpu_custom_call.1} parent=5 // pred_fallthru
        _
      %p282 = scmp.le.s32.totalorder 1, %s21
      %p283 = scmp.lt.s32.totalorder %s21, 3
      %p284 = pnand %p282, %p283
      %p285 = pneg %p284
      // Predicated region
      $region37: #{tpu_custom_call.1} parent=5 // pred_check
        _
      $region38: #{tpu_custom_call.1} parent=5 // pred_check_branch
        %287 = sbr.rel (%p284) target = $region40
      $region39: #{tpu_custom_call.1} parent=5 // pred_region
        %s288 = ssub.s32 %s21, 1
        %s289 = sand.u32 %s46, 1
        %s290 = scalar_lea.sflag [#allocation3], %s289
        %s291 = sand.u32 %s46, 1
        %s292 = smul.addr %s291, 8
        %s293 = scalar_lea.vmem [#allocation2], %s292
        // Predicated region
        $region41: #{tpu_custom_call.1} parent=39 // pred_check
          %p294 = pneg %p59
        $region42: #{tpu_custom_call.1} parent=39 // pred_check_branch
          %296 = sbr.rel (%p294) target = $region44
        $region43: #{tpu_custom_call.1} parent=39 // pred_region
          %297 = dma.done %s290, 128
        $region44: #{tpu_custom_call.1} parent=39 // pred_fallthru
          _
        %s298 = sand.u32 %s26, 1
        %s299 = scalar_lea.sflag [#allocation6], %s298
        %s300 = sand.u32 %s72, 1
        %s301 = smul.addr %s300, 8
        %s302 = scalar_lea.vmem [#allocation5], %s301
        // Predicated region
        $region45: #{tpu_custom_call.1} parent=39 // pred_check
          %p303 = pneg %p85
        $region46: #{tpu_custom_call.1} parent=39 // pred_check_branch
          %305 = sbr.rel (%p303) target = $region48
        $region47: #{tpu_custom_call.1} parent=39 // pred_region
          %306 = dma.done %s299, 128
        $region48: #{tpu_custom_call.1} parent=39 // pred_fallthru
          _
        // Predicated region
        $region49: #{tpu_custom_call.1} parent=39 // pred_check
          %p307 = pneg %p111
        $region50: #{tpu_custom_call.1} parent=39 // pred_check_branch
          %309 = sbr.rel (%p307) target = $region52
        $region51: #{tpu_custom_call.1} parent=39 // pred_region
          %310 = dma.done [#allocation6], 1024
        $region52: #{tpu_custom_call.1} parent=39 // pred_fallthru
          _
        // Predicated region
        $region53: #{tpu_custom_call.1} parent=39 // pred_check
          %p311 = pneg %p137
        $region54: #{tpu_custom_call.1} parent=39 // pred_check_branch
          %313 = sbr.rel (%p311) target = $region56
        $region55: #{tpu_custom_call.1} parent=39 // pred_region
          %314 = dma.done [#allocation9], 1024
        $region56: #{tpu_custom_call.1} parent=39 // pred_fallthru
          _
        %s315 = sand.u32 %s46, 1
        %s316 = scalar_lea.sflag [#allocation3], %s315
        %s317 = sand.u32 %s46, 1
        %s318 = smul.addr %s317, 8
        %s319 = scalar_lea.vmem [#allocation2], %s318
        %p320 = pneg %p59
        %p321 = pneg %p56
        %s322 = sand.u32 %s26, 1
        %s323 = scalar_lea.sflag [#allocation6], %s322
        %s324 = sand.u32 %s72, 1
        %s325 = smul.addr %s324, 8
        %s326 = scalar_lea.vmem [#allocation5], %s325
        %p327 = pneg %p85
        %p328 = pneg %p82
        %p329 = pneg %p111
        %p330 = pneg %p108
        %p331 = pneg %p137
        %p332 = pneg %p134
        %p333 = scmp.lt.s32.totalorder %s31, 0
        %s334 = scalar_select %p333, %s31, 0
        %s335 = scalar_lea.vmem %s4, %s334
        %p336 = pneg %p163
        %p337 = pneg %p160
        %p338 = pneg %p191
        %p339 = pneg %p188
        %s340 = sand.u32 %s178, 1
        %s341 = scalar_lea.sflag [#allocation4], %s340
        %s342 = sand.u32 %s178, 1
        %s343 = smul.addr %s342, 8
        %s344 = scalar_lea.vmem [#allocation10], %s343
        %p345 = scmp.lt.s32.totalorder %s31, 0
        %s346 = scalar_select %p345, %s31, 0
        %s347 = scalar_lea.vmem %s4, %s346
        %v349 = vld [vmem:[%s293] sm:$0xff]
        %v350 = vpack.c.bf16 %v349, %v349
        %v351 = vld [vmem:[%s302] sm:$0xff]
        %v352 = vpack.c.bf16 %v351, %v351
        %v353 = vld [vmem:[#allocation7] sm:$0xf]
        %v354 = vld [vmem:[#allocation7 + $0x4] sm:$0xf]
        %v355 = vld [vmem:[#allocation7 + $0x8] sm:$0xf]
        %v356 = vld [vmem:[#allocation7 + $0xc] sm:$0xf]
        %v357 = vld [vmem:[#allocation7 + $0x10] sm:$0xf]
        %v358 = vld [vmem:[#allocation7 + $0x14] sm:$0xf]
        %v359 = vld [vmem:[#allocation7 + $0x18] sm:$0xf]
        %v360 = vld [vmem:[#allocation7 + $0x1c] sm:$0xf]
        %v361 = vld [vmem:[#allocation7 + $0x20] sm:$0xf]
        %v362 = vld [vmem:[#allocation7 + $0x24] sm:$0xf]
        %v363 = vld [vmem:[#allocation7 + $0x28] sm:$0xf]
        %v364 = vld [vmem:[#allocation7 + $0x2c] sm:$0xf]
        %v365 = vld [vmem:[#allocation7 + $0x30] sm:$0xf]
        %v366 = vld [vmem:[#allocation7 + $0x34] sm:$0xf]
        %v367 = vld [vmem:[#allocation7 + $0x38] sm:$0xf]
        %v368 = vld [vmem:[#allocation7 + $0x3c] sm:$0xf]
        %v369 = vld [vmem:[#allocation8] sm:$0xf]
        %v370 = vld [vmem:[#allocation8 + $0x4] sm:$0xf]
        %v371 = vld [vmem:[#allocation8 + $0x8] sm:$0xf]
        %v372 = vld [vmem:[#allocation8 + $0xc] sm:$0xf]
        %v373 = vld [vmem:[#allocation8 + $0x10] sm:$0xf]
        %v374 = vld [vmem:[#allocation8 + $0x14] sm:$0xf]
        %v375 = vld [vmem:[#allocation8 + $0x18] sm:$0xf]
        %v376 = vld [vmem:[#allocation8 + $0x1c] sm:$0xf]
        %v377 = vld [vmem:[#allocation8 + $0x20] sm:$0xf]
        %v378 = vld [vmem:[#allocation8 + $0x24] sm:$0xf]
        %v379 = vld [vmem:[#allocation8 + $0x28] sm:$0xf]
        %v380 = vld [vmem:[#allocation8 + $0x2c] sm:$0xf]
        %v381 = vld [vmem:[#allocation8 + $0x30] sm:$0xf]
        %v382 = vld [vmem:[#allocation8 + $0x34] sm:$0xf]
        %v383 = vld [vmem:[#allocation8 + $0x38] sm:$0xf]
        %v384 = vld [vmem:[#allocation8 + $0x3c] sm:$0xf]
        %v401 = vunpack.c.l.b16 %v369
        %v402 = vunpack.c.l.b16 %v370
        %v403 = vunpack.c.l.b16 %v371
        %v404 = vunpack.c.l.b16 %v372
        %v405 = vunpack.c.l.b16 %v373
        %v406 = vunpack.c.l.b16 %v374
        %v407 = vunpack.c.l.b16 %v375
        %v408 = vunpack.c.l.b16 %v376
        %v409 = vunpack.c.l.b16 %v377
        %v410 = vunpack.c.l.b16 %v378
        %v411 = vunpack.c.l.b16 %v379
        %v412 = vunpack.c.l.b16 %v380
        %v413 = vunpack.c.l.b16 %v381
        %v414 = vunpack.c.l.b16 %v382
        %v415 = vunpack.c.l.b16 %v383
        %v416 = vunpack.c.l.b16 %v384
        %v417 = vpack.c.b16 %v402, %v401
        %v418 = vpack.c.b16 %v404, %v403
        %v419 = vpack.c.b16 %v406, %v405
        %v420 = vpack.c.b16 %v408, %v407
        %v421 = vpack.c.b16 %v410, %v409
        %v422 = vpack.c.b16 %v412, %v411
        %v423 = vpack.c.b16 %v414, %v413
        %v424 = vpack.c.b16 %v416, %v415
        %433 = vmatprep.subr.bf16.mxu0 0
        %434 = vmatpush1.bf16.msra.mxu0 %v417
        %435 = vmatprep.subr.bf16.mxu0 0
        %436 = vmatpush1.bf16.msra.mxu0 %v418
        %437 = vmatprep.subr.bf16.mxu0 0
        %438 = vmatpush1.bf16.msra.mxu0 %v419
        %439 = vmatprep.subr.bf16.mxu0 0
        %440 = vmatpush1.bf16.msra.mxu0 %v420
        %441 = vmatprep.subr.bf16.mxu0 0
        %442 = vmatpush1.bf16.msra.mxu0 %v421
        %443 = vmatprep.subr.bf16.mxu0 0
        %444 = vmatpush1.bf16.msra.mxu0 %v422
        %445 = vmatprep.subr.bf16.mxu0 0
        %446 = vmatpush1.bf16.msra.mxu0 %v423
        %447 = vmatprep.subr.bf16.mxu0 0
        %448 = vmatpush1.bf16.msra.mxu0 %v424
        %449 = vmatprep.subr.bf16.mxu0 0
        %450 = vmatpush1.bf16.msra.mxu0 0
        %451 = vmatprep.subr.bf16.mxu0 0
        %452 = vmatpush1.bf16.msra.mxu0 0
        %453 = vmatprep.subr.bf16.mxu0 0
        %454 = vmatpush1.bf16.msra.mxu0 0
        %455 = vmatprep.subr.bf16.mxu0 0
        %456 = vmatpush1.bf16.msra.mxu0 0
        %457 = vmatprep.subr.bf16.mxu0 0
        %458 = vmatpush1.bf16.msra.mxu0 0
        %459 = vmatprep.subr.bf16.mxu0 0
        %460 = vmatpush1.bf16.msra.mxu0 0
        %461 = vmatprep.subr.bf16.mxu0 0
        %462 = vmatpush1.bf16.msra.mxu0 0
        %463 = vmatprep.subr.bf16.mxu0 0
        %464 = vmatpush1.bf16.msra.mxu0 0
        %465 = vmatprep.mubr.bf16.mxu0 0
        %466 = vmatmul.mubr.bf16.gmra.mrb[0].mxu0 %v352
        %v467 = vpop.f32.mrb[0].mxu0
        %v468 = vadd.f32 0.0, %v467
        %v469 = vpop.f32.mrb[0].mxu0
        %v470 = vpop.f32.mrb[0].mxu0
        %v471 = vpop.f32.mrb[0].mxu0
        %472 = vdwg.mxu0
        %v489 = vunpack.c.l.b16 %v353
        %v490 = vunpack.c.l.b16 %v354
        %v491 = vunpack.c.l.b16 %v355
        %v492 = vunpack.c.l.b16 %v356
        %v493 = vunpack.c.l.b16 %v357
        %v494 = vunpack.c.l.b16 %v358
        %v495 = vunpack.c.l.b16 %v359
        %v496 = vunpack.c.l.b16 %v360
        %v497 = vunpack.c.l.b16 %v361
        %v498 = vunpack.c.l.b16 %v362
        %v499 = vunpack.c.l.b16 %v363
        %v500 = vunpack.c.l.b16 %v364
        %v501 = vunpack.c.l.b16 %v365
        %v502 = vunpack.c.l.b16 %v366
        %v503 = vunpack.c.l.b16 %v367
        %v504 = vunpack.c.l.b16 %v368
        %v505 = vpack.c.b16 %v490, %v489
        %v506 = vpack.c.b16 %v492, %v491
        %v507 = vpack.c.b16 %v494, %v493
        %v508 = vpack.c.b16 %v496, %v495
        %v509 = vpack.c.b16 %v498, %v497
        %v510 = vpack.c.b16 %v500, %v499
        %v511 = vpack.c.b16 %v502, %v501
        %v512 = vpack.c.b16 %v504, %v503
        %521 = vmatprep.subr.bf16.mxu0 0
        %522 = vmatpush1.bf16.msra.mxu0 %v505
        %523 = vmatprep.subr.bf16.mxu0 0
        %524 = vmatpush1.bf16.msra.mxu0 %v506
        %525 = vmatprep.subr.bf16.mxu0 0
        %526 = vmatpush1.bf16.msra.mxu0 %v507
        %527 = vmatprep.subr.bf16.mxu0 0
        %528 = vmatpush1.bf16.msra.mxu0 %v508
        %529 = vmatprep.subr.bf16.mxu0 0
        %530 = vmatpush1.bf16.msra.mxu0 %v509
        %531 = vmatprep.subr.bf16.mxu0 0
        %532 = vmatpush1.bf16.msra.mxu0 %v510
        %533 = vmatprep.subr.bf16.mxu0 0
        %534 = vmatpush1.bf16.msra.mxu0 %v511
        %535 = vmatprep.subr.bf16.mxu0 0
        %536 = vmatpush1.bf16.msra.mxu0 %v512
        %537 = vmatprep.subr.bf16.mxu0 0
        %538 = vmatpush1.bf16.msra.mxu0 0
        %539 = vmatprep.subr.bf16.mxu0 0
        %540 = vmatpush1.bf16.msra.mxu0 0
        %541 = vmatprep.subr.bf16.mxu0 0
        %542 = vmatpush1.bf16.msra.mxu0 0
        %543 = vmatprep.subr.bf16.mxu0 0
        %544 = vmatpush1.bf16.msra.mxu0 0
        %545 = vmatprep.subr.bf16.mxu0 0
        %546 = vmatpush1.bf16.msra.mxu0 0
        %547 = vmatprep.subr.bf16.mxu0 0
        %548 = vmatpush1.bf16.msra.mxu0 0
        %549 = vmatprep.subr.bf16.mxu0 0
        %550 = vmatpush1.bf16.msra.mxu0 0
        %551 = vmatprep.subr.bf16.mxu0 0
        %552 = vmatpush1.bf16.msra.mxu0 0
        %553 = vmatprep.mubr.bf16.mxu0 0
        %554 = vmatmul.mubr.bf16.gmra.mrb[0].mxu0 %v350
        %v555 = vpop.f32.mrb[0].mxu0
        %v556 = vadd.f32 %v468, %v555
        %v557 = vpop.f32.mrb[0].mxu0
        %v558 = vpop.f32.mrb[0].mxu0
        %v559 = vpop.f32.mrb[0].mxu0
        %560 = vdwg.mxu0
        %v561 = vld [vmem:[%s347] sm:$0x1]
        %v563 = vlaneseq
        %v564 = vshrl.u32 %v563, 7
        %v565 = vsub.s32 0, %v564
        %v566 = vrot.slane %v561, %v565
        %v568 = vadd.f32 %v556, %v566
        %569 = vst [vmem:[%s344] sm:$0xff] %v568
        %s570 = sand.u32 %s178, 1
        %s571 = scalar_lea.sflag [#allocation4], %s570
        %s572 = sand.u32 %s178, 1
        %s573 = smul.addr %s572, 8
        %s574 = scalar_lea.vmem [#allocation10], %s573
        // Predicated region
        $region57: #{tpu_custom_call.1} parent=39 // pred_check
          %p575 = pneg %p188
        $region58: #{tpu_custom_call.1} parent=39 // pred_check_branch
          %577 = sbr.rel (%p575) target = $region60
        $region59: #{tpu_custom_call.1} parent=39 // pred_region
          %s579 = ssub.s32 128, 128
          %580 = vsyncadd %s571, %s579
          %s581 = sadd.s32 %s31, %s30
          %s582 = smul.addr %s581, 128
          %s583 = scalar_lea.hbm %s5, %s582
          %s585 = sshll.u32 %s574, 4
          %s586 = int_to_ptr.vmem [resolvable:$true] %s585
          %588 = dma.vmem_to_hbm [thread:$0]  %s586, 128, %s583, %s571
        $region60: #{tpu_custom_call.1} parent=39 // pred_fallthru
          _
      $region40: #{tpu_custom_call.1} parent=5 // pred_fallthru
        _
      %p589 = scmp.le.s32.totalorder 2, %s21
      // Predicated region
      $region61: #{tpu_custom_call.1} parent=5 // pred_check
        %p590 = pneg %p589
      $region62: #{tpu_custom_call.1} parent=5 // pred_check_branch
        %592 = sbr.rel (%p590) target = $region64
      $region63: #{tpu_custom_call.1} parent=5 // pred_region
        %s593 = ssub.s32 %s21, 2
        // Predicated region
        $region65: #{tpu_custom_call.1} parent=63 // pred_check
          %p594 = pneg %p194
        $region66: #{tpu_custom_call.1} parent=63 // pred_check_branch
          %596 = sbr.rel (%p594) target = $region68
        $region67: #{tpu_custom_call.1} parent=63 // pred_region
          %s597 = sand.u32 %s179, 1
          %s598 = scalar_lea.sflag [#allocation4], %s597
          %s599 = sand.u32 %s179, 1
          %s600 = smul.addr %s599, 8
          %s601 = scalar_lea.vmem [#allocation10], %s600
          %602 = dma.done %s598, 128
        $region68: #{tpu_custom_call.1} parent=63 // pred_fallthru
          _
      $region64: #{tpu_custom_call.1} parent=5 // pred_fallthru
        _
    $region6: #{tpu_custom_call.1} parent=1 // loop_footer
      %s25 = sadd.s32 1, %s21
    $region7: #{tpu_custom_call.1} parent=1 // loop_footer_branch
      %20 = sbr.rel target = $region3
    $region8: #{tpu_custom_call.1} parent=1 // loop_exit
      _
    %603 = vsyncpa [#allocation3], 1
    %s604 = scalar_lea.sflag [#allocation3], 1
    %605 = vsyncpa %s604, 1
    %606 = vsyncpa [#allocation6], 1
    %s607 = scalar_lea.sflag [#allocation6], 1
    %608 = vsyncpa %s607, 1
    %609 = vsyncpa [#allocation9], 1
    %610 = vsyncpa [#allocation4], 1
    %s611 = scalar_lea.sflag [#allocation4], 1
    %612 = vsyncpa %s611, 1

</llo_original>
